<compile_context>
chip_gen: v5e
topology: v5e:2x2
jax: 0.10.0
libtpu: 0.0.40
codegen_flags: <defaults>
</compile_context>

<pallas_src>
import functools
import numpy as np
import jax
import jax.numpy as jnp
from jax import lax
from jax.experimental import pallas as pl
from jax.experimental.pallas import tpu as pltpu

K = 3          # kernel_size
EPS = 1e-5     # BatchNorm eps (PyTorch default)


# -------------------- fused kernel --------------------
def _res_layer_kernel(x_ref, mask_ref, w1_ref, b1_ref, gamma_ref, beta_ref,
                      w2sk_ref, b2_ref, bsk_ref, out_ref, slab, *, H, W):
    Cin, n = x_ref.shape
    Cout = out_ref.shape[0]
    bf16 = jnp.bfloat16

    x = x_ref[...]                                   # (Cin, n) f32, channel-major

    # rhs slab (bf16): rows [0, Cin)             = x  (feeds the fused 1x1 skip)
    #                  rows [Cin+t*Cin, +Cin)    = tap t of the current activation,
    #                  t = ky*3 + kx, shifted along the flattened (b,y,x) lane axis
    #                  and masked at the image borders.
    slab[0:Cin, :] = x.astype(bf16)

    def fill_taps(src):                              # src: (Cin, n) f32
        for t in range(K * K):
            ky, kx = t // K, t % K
            d = (ky - 1) * W + (kx - 1)              # flattened source offset of tap
            if d == 0:
                shifted = src
            else:
                shifted = pltpu.roll(src, (-d) % n, axis=1)   # XLU lane rotate (cheap)
            tap = shifted * mask_ref[t:t + 1, :]              # zero out-of-image taps
            slab[Cin + t * Cin: Cin + (t + 1) * Cin, :] = tap.astype(bf16)

    # ---- conv1 (3x3 'same'): ONE packed MXU matmul (Cin, Cin+9Cin) @ (Cin+9Cin, n)
    fill_taps(x)
    acc1 = jnp.dot(w1_ref[...], slab[...], preferred_element_type=jnp.float32)
    h1 = jnp.maximum(acc1 + b1_ref[...], 0.0)        # bias + ReLU, (Cin, n) lane-dense

    # ---- BatchNorm2d (training-mode batch stats), two-pass for stability ----
    inv_n = 1.0 / float(n)
    mean = jnp.sum(h1, axis=1, keepdims=True) * inv_n          # (Cin, 1)
    cent = h1 - mean
    var = jnp.sum(cent * cent, axis=1, keepdims=True) * inv_n  # biased variance
    h1n = cent * (gamma_ref[...] * lax.rsqrt(var + EPS)) + beta_ref[...]
    # Dropout(p=0) -> identity.

    # ---- conv2 (3x3 'same') + 1x1 skip fused into ONE block matmul ----
    # lhs = [[0, W2p], [Wsk, 0]]  -> rows [0,Cout) = conv2, rows [Cout,2Cout) = skip;
    # the skip stays OUTSIDE the ReLU, matching relu(conv2(h1)) + skip(x).
    fill_taps(h1n)                                   # rows [0,Cin) still hold x
    big = jnp.dot(w2sk_ref[...], slab[...], preferred_element_type=jnp.float32)
    h2 = jnp.maximum(big[0:Cout, :] + b2_ref[...], 0.0)
    out_ref[...] = h2 + big[Cout:2 * Cout, :] + bsk_ref[...]   # lane-dense (Cout, n)


# -------------------- wrapper --------------------
def res_layer_forward(x_nchw, params):
    """x_nchw: (N, C_in, H, W) float32 -> (N, C_out, H, W) float32."""
    B, Cin, H, W = x_nchw.shape
    n = B * H * W
    Cout = params["w2"].shape[-1]
    bf16 = jnp.bfloat16
    Kin = Cin + K * K * Cin                          # packed contraction depth

    # channel-major, lane-dense activation: (Cin, B*H*W) f32
    x_cm = jnp.transpose(x_nchw, (1, 0, 2, 3)).reshape(Cin, n).astype(jnp.float32)

    # packed channel-major weights: lhs @ slab, slab rows = [x ; 9 taps]
    w1p = jnp.transpose(params["w1"], (3, 0, 1, 2)).reshape(Cin, K * K * Cin)
    w2p = jnp.transpose(params["w2"], (3, 0, 1, 2)).reshape(Cout, K * K * Cin)
    wsk = jnp.transpose(params["wsk"], (1, 0))                    # (Cout, Cin)
    lhs1 = jnp.concatenate([jnp.zeros((Cin, Cin), jnp.float32), w1p], axis=1)
    lhs2 = jnp.concatenate(
        [jnp.concatenate([jnp.zeros((Cout, Cin), jnp.float32), w2p], axis=1),
         jnp.concatenate([wsk, jnp.zeros((Cout, K * K * Cin), jnp.float32)], axis=1)],
        axis=0)
    lhs1 = lhs1.astype(bf16)                                      # (Cin, Kin)
    lhs2 = lhs2.astype(bf16)                                      # (2*Cout, Kin)

    # per-tap validity masks over the flattened (b, y, x) lane axis (host precompute)
    pp = np.arange(n)
    yy = (pp // W) % H
    xx = pp % W
    masks_np = np.zeros((K * K, n), np.float32)
    for t in range(K * K):
        ky, kx = t // K, t % K
        masks_np[t] = (((yy + ky - 1) >= 0) & ((yy + ky - 1) < H) &
                       ((xx + kx - 1) >= 0) & ((xx + kx - 1) < W))
    masks = jnp.asarray(masks_np, jnp.float32)

    # biases / BN affine as (C, 1) f32 -> broadcast over the lane axis in-kernel
    b1 = params["b1"].reshape(Cin, 1).astype(jnp.float32)
    gamma = params["gamma"].reshape(Cin, 1).astype(jnp.float32)
    beta = params["beta"].reshape(Cin, 1).astype(jnp.float32)
    b2 = params["b2"].reshape(Cout, 1).astype(jnp.float32)
    bsk = params["bsk"].reshape(Cout, 1).astype(jnp.float32)

    vmem = pl.BlockSpec(memory_space=pltpu.MemorySpace.VMEM)
    kernel = functools.partial(_res_layer_kernel, H=H, W=W)

    out_cm = pl.pallas_call(
        kernel,
        out_shape=jax.ShapeDtypeStruct((Cout, n), jnp.float32),
        in_specs=[vmem] * 9,
        out_specs=vmem,
        scratch_shapes=[pltpu.VMEM((Kin, n), bf16)],   # single reused bf16 im2col slab
        compiler_params=pltpu.CompilerParams(vmem_limit_bytes=32 * 1024 * 1024),
    )(x_cm, masks, lhs1, b1, gamma, beta, lhs2, b2, bsk)

    # (Cout, B*H*W) -> (B, Cout, H, W): pure layout plumbing on a tiny tensor
    return jnp.transpose(out_cm.reshape(Cout, B, H, W), (1, 0, 2, 3))


# -------------------- deterministic parameter init --------------------
def init_params(key, in_ch, out_ch, kernel_size=K):
    k1, k2, k3, k4, k5, k6 = jax.random.split(key, 6)
    s = 1.0 / np.sqrt(in_ch * kernel_size * kernel_size)
    p = {
        "w1": jax.random.uniform(k1, (kernel_size, kernel_size, in_ch, in_ch),
                                 jnp.float32, -s, s),
        "b1": jax.random.uniform(k2, (in_ch,), jnp.float32, -s, s),
        "w2": jax.random.uniform(k3, (kernel_size, kernel_size, in_ch, out_ch),
                                 jnp.float32, -s, s),
        "b2": jax.random.uniform(k4, (out_ch,), jnp.float32, -s, s),
        "gamma": jnp.ones((in_ch,), jnp.float32),    # BatchNorm defaults
        "beta": jnp.zeros((in_ch,), jnp.float32),
    }
    if in_ch != out_ch:
        ss = 1.0 / np.sqrt(in_ch)
        p["wsk"] = jax.random.uniform(k5, (in_ch, out_ch), jnp.float32, -ss, ss)
        p["bsk"] = jax.random.uniform(k6, (out_ch,), jnp.float32, -ss, ss)
    else:
        p["wsk"] = jnp.eye(in_ch, dtype=jnp.float32)     # Identity skip
        p["bsk"] = jnp.zeros((in_ch,), jnp.float32)
    return p


# -------------------- pure-JAX f32 reference (for verification) --------------------
def ref_forward(x_nchw, params):
    x = jnp.transpose(x_nchw, (0, 2, 3, 1)).astype(jnp.float32)
    dn = ("NHWC", "HWIO", "NHWC")

    def conv(inp, w, b):
        return lax.conv_general_dilated(inp, w, (1, 1), "SAME",
                                        dimension_numbers=dn) + b.reshape(1, 1, 1, -1)

    h1 = jax.nn.relu(conv(x, params["w1"], params["b1"]))
    mean = h1.mean((0, 1, 2))
    var = ((h1 - mean) ** 2).mean((0, 1, 2))
    h1 = (h1 - mean) / jnp.sqrt(var + EPS) * params["gamma"] + params["beta"]
    h2 = jax.nn.relu(conv(h1, params["w2"], params["b2"]))
    skip = jnp.einsum("bhwc,co->bhwo", x, params["wsk"]) + params["bsk"].reshape(1, 1, 1, -1)
    return jnp.transpose(h2 + skip, (0, 3, 1, 2))


if __name__ == "__main__":
    batch, Hs, Ws = 2, 16, 16
    key = jax.random.PRNGKey(0)

    # config 1: in_ch != out_ch (1x1 conv skip)
    kx1, kp1, kx2, kp2 = jax.random.split(key, 4)
    x1 = jax.random.normal(kx1, (batch, 4, Hs, Ws), jnp.float32)     # PyTorch NCHW input
    p1 = init_params(kp1, 4, 8)
    out1 = jax.block_until_ready(res_layer_forward(x1, p1))
    ref1 = jax.block_until_ready(ref_forward(x1, p1))
    # bf16 MXU inputs (f32 accumulate) vs f32 reference -> slightly relaxed tolerance
    np.testing.assert_allclose(np.asarray(out1), np.asarray(ref1), rtol=2e-2, atol=2e-2)
    assert out1.shape == (batch, 8, Hs, Ws)

    # config 2: in_ch == out_ch (Identity skip, realized with identity 1x1 weight)
    x2 = jax.random.normal(kx2, (batch, 4, Hs, Ws), jnp.float32)
    p2 = init_params(kp2, 4, 4)
    out2 = jax.block_until_ready(res_layer_forward(x2, p2))
    ref2 = jax.block_until_ready(ref_forward(x2, p2))
    np.testing.assert_allclose(np.asarray(out2), np.asarray(ref2), rtol=2e-2, atol=2e-2)
    assert out2.shape == (batch, 4, Hs, Ws)

    print("KERNEL_OK")
</pallas_src>

<mosaic_0001>
module attributes {stable_mosaic.version = 11 : i64} {
  func.func @_res_layer_kernel(%arg0: memref<4x512xf32, #tpu.memory_space<vmem>>, %arg1: memref<9x512xf32, #tpu.memory_space<vmem>>, %arg2: memref<4x40xbf16, #tpu.memory_space<vmem>>, %arg3: memref<4x1xf32, #tpu.memory_space<vmem>>, %arg4: memref<4x1xf32, #tpu.memory_space<vmem>>, %arg5: memref<4x1xf32, #tpu.memory_space<vmem>>, %arg6: memref<16x40xbf16, #tpu.memory_space<vmem>>, %arg7: memref<8x1xf32, #tpu.memory_space<vmem>>, %arg8: memref<8x1xf32, #tpu.memory_space<vmem>>, %arg9: memref<8x512xf32, #tpu.memory_space<vmem>>, %arg10: memref<40x512xbf16, #tpu.memory_space<vmem>>) attributes {dimension_semantics = [], scalar_prefetch = 0 : i64, scratch_operands = 1 : i64, tpu.core_type = #tpu.core_type<tc>} {
    %c0 = arith.constant 0 : index
    %c0_0 = arith.constant 0 : index
    %0 = vector.load %arg0[%c0, %c0_0] : memref<4x512xf32, #tpu.memory_space<vmem>>, vector<4x512xf32>
    %1 = arith.truncf %0 : vector<4x512xf32> to vector<4x512xbf16>
    %c0_1 = arith.constant 0 : index
    %c0_2 = arith.constant 0 : index
    %2 = vector.load %arg10[%c0_1, %c0_2] : memref<40x512xbf16, #tpu.memory_space<vmem>>, vector<4x512xbf16>
    tpu.vector_store %arg10[%c0_1, %c0_2], %1 {strides = array<i32>} : memref<40x512xbf16, #tpu.memory_space<vmem>>, vector<4x512xbf16>,
    %c17_i32 = arith.constant 17 : i32
    %3 = tpu.dynamic_rotate %0 by %c17_i32 dim 1 : vector<4x512xf32>, i32 -> vector<4x512xf32>
    %c0_3 = arith.constant 0 : index
    %c0_4 = arith.constant 0 : index
    %4 = vector.load %arg1[%c0_3, %c0_4] : memref<9x512xf32, #tpu.memory_space<vmem>>, vector<1x512xf32>
    %5 = vector.broadcast %4 : vector<1x512xf32> to vector<4x512xf32>
    %6 = arith.mulf %3, %5 : vector<4x512xf32>
    %7 = arith.truncf %6 : vector<4x512xf32> to vector<4x512xbf16>
    %c4 = arith.constant 4 : index
    %c0_5 = arith.constant 0 : index
    %8 = vector.load %arg10[%c4, %c0_5] : memref<40x512xbf16, #tpu.memory_space<vmem>>, vector<4x512xbf16>
    tpu.vector_store %arg10[%c4, %c0_5], %7 {strides = array<i32>} : memref<40x512xbf16, #tpu.memory_space<vmem>>, vector<4x512xbf16>,
    %c16_i32 = arith.constant 16 : i32
    %9 = tpu.dynamic_rotate %0 by %c16_i32 dim 1 : vector<4x512xf32>, i32 -> vector<4x512xf32>
    %c1 = arith.constant 1 : index
    %c0_6 = arith.constant 0 : index
    %10 = vector.load %arg1[%c1, %c0_6] : memref<9x512xf32, #tpu.memory_space<vmem>>, vector<1x512xf32>
    %11 = vector.broadcast %10 : vector<1x512xf32> to vector<4x512xf32>
    %12 = arith.mulf %9, %11 : vector<4x512xf32>
    %13 = arith.truncf %12 : vector<4x512xf32> to vector<4x512xbf16>
    %c8 = arith.constant 8 : index
    %c0_7 = arith.constant 0 : index
    %14 = vector.load %arg10[%c8, %c0_7] : memref<40x512xbf16, #tpu.memory_space<vmem>>, vector<4x512xbf16>
    tpu.vector_store %arg10[%c8, %c0_7], %13 {strides = array<i32>} : memref<40x512xbf16, #tpu.memory_space<vmem>>, vector<4x512xbf16>,
    %c15_i32 = arith.constant 15 : i32
    %15 = tpu.dynamic_rotate %0 by %c15_i32 dim 1 : vector<4x512xf32>, i32 -> vector<4x512xf32>
    %c2 = arith.constant 2 : index
    %c0_8 = arith.constant 0 : index
    %16 = vector.load %arg1[%c2, %c0_8] : memref<9x512xf32, #tpu.memory_space<vmem>>, vector<1x512xf32>
    %17 = vector.broadcast %16 : vector<1x512xf32> to vector<4x512xf32>
    %18 = arith.mulf %15, %17 : vector<4x512xf32>
    %19 = arith.truncf %18 : vector<4x512xf32> to vector<4x512xbf16>
    %c12 = arith.constant 12 : index
    %c0_9 = arith.constant 0 : index
    %20 = vector.load %arg10[%c12, %c0_9] : memref<40x512xbf16, #tpu.memory_space<vmem>>, vector<4x512xbf16>
    tpu.vector_store %arg10[%c12, %c0_9], %19 {strides = array<i32>} : memref<40x512xbf16, #tpu.memory_space<vmem>>, vector<4x512xbf16>,
    %c1_i32 = arith.constant 1 : i32
    %21 = tpu.dynamic_rotate %0 by %c1_i32 dim 1 : vector<4x512xf32>, i32 -> vector<4x512xf32>
    %c3 = arith.constant 3 : index
    %c0_10 = arith.constant 0 : index
    %22 = vector.load %arg1[%c3, %c0_10] : memref<9x512xf32, #tpu.memory_space<vmem>>, vector<1x512xf32>
    %23 = vector.broadcast %22 : vector<1x512xf32> to vector<4x512xf32>
    %24 = arith.mulf %21, %23 : vector<4x512xf32>
    %25 = arith.truncf %24 : vector<4x512xf32> to vector<4x512xbf16>
    %c16 = arith.constant 16 : index
    %c0_11 = arith.constant 0 : index
    %26 = vector.load %arg10[%c16, %c0_11] : memref<40x512xbf16, #tpu.memory_space<vmem>>, vector<4x512xbf16>
    tpu.vector_store %arg10[%c16, %c0_11], %25 {strides = array<i32>} : memref<40x512xbf16, #tpu.memory_space<vmem>>, vector<4x512xbf16>,
    %c4_12 = arith.constant 4 : index
    %c0_13 = arith.constant 0 : index
    %27 = vector.load %arg1[%c4_12, %c0_13] : memref<9x512xf32, #tpu.memory_space<vmem>>, vector<1x512xf32>
    %28 = vector.broadcast %27 : vector<1x512xf32> to vector<4x512xf32>
    %29 = arith.mulf %0, %28 : vector<4x512xf32>
    %30 = arith.truncf %29 : vector<4x512xf32> to vector<4x512xbf16>
    %c20 = arith.constant 20 : index
    %c0_14 = arith.constant 0 : index
    %31 = vector.load %arg10[%c20, %c0_14] : memref<40x512xbf16, #tpu.memory_space<vmem>>, vector<4x512xbf16>
    tpu.vector_store %arg10[%c20, %c0_14], %30 {strides = array<i32>} : memref<40x512xbf16, #tpu.memory_space<vmem>>, vector<4x512xbf16>,
    %c511_i32 = arith.constant 511 : i32
    %32 = tpu.dynamic_rotate %0 by %c511_i32 dim 1 : vector<4x512xf32>, i32 -> vector<4x512xf32>
    %c5 = arith.constant 5 : index
    %c0_15 = arith.constant 0 : index
    %33 = vector.load %arg1[%c5, %c0_15] : memref<9x512xf32, #tpu.memory_space<vmem>>, vector<1x512xf32>
    %34 = vector.broadcast %33 : vector<1x512xf32> to vector<4x512xf32>
    %35 = arith.mulf %32, %34 : vector<4x512xf32>
    %36 = arith.truncf %35 : vector<4x512xf32> to vector<4x512xbf16>
    %c24 = arith.constant 24 : index
    %c0_16 = arith.constant 0 : index
    %37 = vector.load %arg10[%c24, %c0_16] : memref<40x512xbf16, #tpu.memory_space<vmem>>, vector<4x512xbf16>
    tpu.vector_store %arg10[%c24, %c0_16], %36 {strides = array<i32>} : memref<40x512xbf16, #tpu.memory_space<vmem>>, vector<4x512xbf16>,
    %c497_i32 = arith.constant 497 : i32
    %38 = tpu.dynamic_rotate %0 by %c497_i32 dim 1 : vector<4x512xf32>, i32 -> vector<4x512xf32>
    %c6 = arith.constant 6 : index
    %c0_17 = arith.constant 0 : index
    %39 = vector.load %arg1[%c6, %c0_17] : memref<9x512xf32, #tpu.memory_space<vmem>>, vector<1x512xf32>
    %40 = vector.broadcast %39 : vector<1x512xf32> to vector<4x512xf32>
    %41 = arith.mulf %38, %40 : vector<4x512xf32>
    %42 = arith.truncf %41 : vector<4x512xf32> to vector<4x512xbf16>
    %c28 = arith.constant 28 : index
    %c0_18 = arith.constant 0 : index
    %43 = vector.load %arg10[%c28, %c0_18] : memref<40x512xbf16, #tpu.memory_space<vmem>>, vector<4x512xbf16>
    tpu.vector_store %arg10[%c28, %c0_18], %42 {strides = array<i32>} : memref<40x512xbf16, #tpu.memory_space<vmem>>, vector<4x512xbf16>,
    %c496_i32 = arith.constant 496 : i32
    %44 = tpu.dynamic_rotate %0 by %c496_i32 dim 1 : vector<4x512xf32>, i32 -> vector<4x512xf32>
    %c7 = arith.constant 7 : index
    %c0_19 = arith.constant 0 : index
    %45 = vector.load %arg1[%c7, %c0_19] : memref<9x512xf32, #tpu.memory_space<vmem>>, vector<1x512xf32>
    %46 = vector.broadcast %45 : vector<1x512xf32> to vector<4x512xf32>
    %47 = arith.mulf %44, %46 : vector<4x512xf32>
    %48 = arith.truncf %47 : vector<4x512xf32> to vector<4x512xbf16>
    %c32 = arith.constant 32 : index
    %c0_20 = arith.constant 0 : index
    %49 = vector.load %arg10[%c32, %c0_20] : memref<40x512xbf16, #tpu.memory_space<vmem>>, vector<4x512xbf16>
    tpu.vector_store %arg10[%c32, %c0_20], %48 {strides = array<i32>} : memref<40x512xbf16, #tpu.memory_space<vmem>>, vector<4x512xbf16>,
    %c495_i32 = arith.constant 495 : i32
    %50 = tpu.dynamic_rotate %0 by %c495_i32 dim 1 : vector<4x512xf32>, i32 -> vector<4x512xf32>
    %c8_21 = arith.constant 8 : index
    %c0_22 = arith.constant 0 : index
    %51 = vector.load %arg1[%c8_21, %c0_22] : memref<9x512xf32, #tpu.memory_space<vmem>>, vector<1x512xf32>
    %52 = vector.broadcast %51 : vector<1x512xf32> to vector<4x512xf32>
    %53 = arith.mulf %50, %52 : vector<4x512xf32>
    %54 = arith.truncf %53 : vector<4x512xf32> to vector<4x512xbf16>
    %c36 = arith.constant 36 : index
    %c0_23 = arith.constant 0 : index
    %55 = vector.load %arg10[%c36, %c0_23] : memref<40x512xbf16, #tpu.memory_space<vmem>>, vector<4x512xbf16>
    tpu.vector_store %arg10[%c36, %c0_23], %54 {strides = array<i32>} : memref<40x512xbf16, #tpu.memory_space<vmem>>, vector<4x512xbf16>,
    %c0_24 = arith.constant 0 : index
    %c0_25 = arith.constant 0 : index
    %56 = vector.load %arg2[%c0_24, %c0_25] : memref<4x40xbf16, #tpu.memory_space<vmem>>, vector<4x40xbf16>
    %c0_26 = arith.constant 0 : index
    %c0_27 = arith.constant 0 : index
    %57 = vector.load %arg10[%c0_26, %c0_27] : memref<40x512xbf16, #tpu.memory_space<vmem>>, vector<40x512xbf16>
    %cst = arith.constant dense<0.000000e+00> : vector<4x512xf32>
    %58 = tpu.matmul %56, %57, %cst {dimension_numbers = #tpu.dot_dimension_numbers<[1], [0], [0], [1], [0, 0, 1, 1], [], []>} : vector<4x40xbf16>, vector<40x512xbf16>, vector<4x512xf32> -> vector<4x512xf32>
    %c0_28 = arith.constant 0 : index
    %c0_29 = arith.constant 0 : index
    %59 = vector.load %arg3[%c0_28, %c0_29] : memref<4x1xf32, #tpu.memory_space<vmem>>, vector<4x1xf32>
    %60 = vector.broadcast %59 : vector<4x1xf32> to vector<4x512xf32>
    %61 = arith.addf %58, %60 : vector<4x512xf32>
    %cst_30 = arith.constant 0.000000e+00 : f32
    %62 = vector.broadcast %cst_30 : f32 to vector<4x512xf32>
    %63 = arith.maximumf %61, %62 : vector<4x512xf32>
    %cst_31 = arith.constant dense<0.000000e+00> : vector<4xf32>
    %64 = vector.multi_reduction <add>, %63, %cst_31 [1] : vector<4x512xf32> to vector<4xf32>
    %65 = vector.shape_cast %64 : vector<4xf32> to vector<4x1xf32>
    %cst_32 = arith.constant 0.001953125 : f32
    %66 = vector.broadcast %cst_32 : f32 to vector<4x1xf32>
    %67 = arith.mulf %65, %66 : vector<4x1xf32>
    %68 = vector.broadcast %67 : vector<4x1xf32> to vector<4x512xf32>
    %69 = arith.subf %63, %68 : vector<4x512xf32>
    %70 = arith.mulf %69, %69 : vector<4x512xf32>
    %cst_33 = arith.constant dense<0.000000e+00> : vector<4xf32>
    %71 = vector.multi_reduction <add>, %70, %cst_33 [1] : vector<4x512xf32> to vector<4xf32>
    %72 = vector.shape_cast %71 : vector<4xf32> to vector<4x1xf32>
    %cst_34 = arith.constant 0.001953125 : f32
    %73 = vector.broadcast %cst_34 : f32 to vector<4x1xf32>
    %74 = arith.mulf %72, %73 : vector<4x1xf32>
    %c0_35 = arith.constant 0 : index
    %c0_36 = arith.constant 0 : index
    %75 = vector.load %arg4[%c0_35, %c0_36] : memref<4x1xf32, #tpu.memory_space<vmem>>, vector<4x1xf32>
    %cst_37 = arith.constant 9.99999974E-6 : f32
    %76 = vector.broadcast %cst_37 : f32 to vector<4x1xf32>
    %77 = arith.addf %74, %76 : vector<4x1xf32>
    %78 = math.rsqrt %77 : vector<4x1xf32>
    %79 = arith.mulf %75, %78 : vector<4x1xf32>
    %80 = vector.broadcast %79 : vector<4x1xf32> to vector<4x512xf32>
    %81 = arith.mulf %69, %80 : vector<4x512xf32>
    %c0_38 = arith.constant 0 : index
    %c0_39 = arith.constant 0 : index
    %82 = vector.load %arg5[%c0_38, %c0_39] : memref<4x1xf32, #tpu.memory_space<vmem>>, vector<4x1xf32>
    %83 = vector.broadcast %82 : vector<4x1xf32> to vector<4x512xf32>
    %84 = arith.addf %81, %83 : vector<4x512xf32>
    %c17_i32_40 = arith.constant 17 : i32
    %85 = tpu.dynamic_rotate %84 by %c17_i32_40 dim 1 : vector<4x512xf32>, i32 -> vector<4x512xf32>
    %c0_41 = arith.constant 0 : index
    %c0_42 = arith.constant 0 : index
    %86 = vector.load %arg1[%c0_41, %c0_42] : memref<9x512xf32, #tpu.memory_space<vmem>>, vector<1x512xf32>
    %87 = vector.broadcast %86 : vector<1x512xf32> to vector<4x512xf32>
    %88 = arith.mulf %85, %87 : vector<4x512xf32>
    %89 = arith.truncf %88 : vector<4x512xf32> to vector<4x512xbf16>
    %c4_43 = arith.constant 4 : index
    %c0_44 = arith.constant 0 : index
    %90 = vector.load %arg10[%c4_43, %c0_44] : memref<40x512xbf16, #tpu.memory_space<vmem>>, vector<4x512xbf16>
    tpu.vector_store %arg10[%c4_43, %c0_44], %89 {strides = array<i32>} : memref<40x512xbf16, #tpu.memory_space<vmem>>, vector<4x512xbf16>,
    %c16_i32_45 = arith.constant 16 : i32
    %91 = tpu.dynamic_rotate %84 by %c16_i32_45 dim 1 : vector<4x512xf32>, i32 -> vector<4x512xf32>
    %c1_46 = arith.constant 1 : index
    %c0_47 = arith.constant 0 : index
    %92 = vector.load %arg1[%c1_46, %c0_47] : memref<9x512xf32, #tpu.memory_space<vmem>>, vector<1x512xf32>
    %93 = vector.broadcast %92 : vector<1x512xf32> to vector<4x512xf32>
    %94 = arith.mulf %91, %93 : vector<4x512xf32>
    %95 = arith.truncf %94 : vector<4x512xf32> to vector<4x512xbf16>
    %c8_48 = arith.constant 8 : index
    %c0_49 = arith.constant 0 : index
    %96 = vector.load %arg10[%c8_48, %c0_49] : memref<40x512xbf16, #tpu.memory_space<vmem>>, vector<4x512xbf16>
    tpu.vector_store %arg10[%c8_48, %c0_49], %95 {strides = array<i32>} : memref<40x512xbf16, #tpu.memory_space<vmem>>, vector<4x512xbf16>,
    %c15_i32_50 = arith.constant 15 : i32
    %97 = tpu.dynamic_rotate %84 by %c15_i32_50 dim 1 : vector<4x512xf32>, i32 -> vector<4x512xf32>
    %c2_51 = arith.constant 2 : index
    %c0_52 = arith.constant 0 : index
    %98 = vector.load %arg1[%c2_51, %c0_52] : memref<9x512xf32, #tpu.memory_space<vmem>>, vector<1x512xf32>
    %99 = vector.broadcast %98 : vector<1x512xf32> to vector<4x512xf32>
    %100 = arith.mulf %97, %99 : vector<4x512xf32>
    %101 = arith.truncf %100 : vector<4x512xf32> to vector<4x512xbf16>
    %c12_53 = arith.constant 12 : index
    %c0_54 = arith.constant 0 : index
    %102 = vector.load %arg10[%c12_53, %c0_54] : memref<40x512xbf16, #tpu.memory_space<vmem>>, vector<4x512xbf16>
    tpu.vector_store %arg10[%c12_53, %c0_54], %101 {strides = array<i32>} : memref<40x512xbf16, #tpu.memory_space<vmem>>, vector<4x512xbf16>,
    %c1_i32_55 = arith.constant 1 : i32
    %103 = tpu.dynamic_rotate %84 by %c1_i32_55 dim 1 : vector<4x512xf32>, i32 -> vector<4x512xf32>
    %c3_56 = arith.constant 3 : index
    %c0_57 = arith.constant 0 : index
    %104 = vector.load %arg1[%c3_56, %c0_57] : memref<9x512xf32, #tpu.memory_space<vmem>>, vector<1x512xf32>
    %105 = vector.broadcast %104 : vector<1x512xf32> to vector<4x512xf32>
    %106 = arith.mulf %103, %105 : vector<4x512xf32>
    %107 = arith.truncf %106 : vector<4x512xf32> to vector<4x512xbf16>
    %c16_58 = arith.constant 16 : index
    %c0_59 = arith.constant 0 : index
    %108 = vector.load %arg10[%c16_58, %c0_59] : memref<40x512xbf16, #tpu.memory_space<vmem>>, vector<4x512xbf16>
    tpu.vector_store %arg10[%c16_58, %c0_59], %107 {strides = array<i32>} : memref<40x512xbf16, #tpu.memory_space<vmem>>, vector<4x512xbf16>,
    %c4_60 = arith.constant 4 : index
    %c0_61 = arith.constant 0 : index
    %109 = vector.load %arg1[%c4_60, %c0_61] : memref<9x512xf32, #tpu.memory_space<vmem>>, vector<1x512xf32>
    %110 = vector.broadcast %109 : vector<1x512xf32> to vector<4x512xf32>
    %111 = arith.mulf %84, %110 : vector<4x512xf32>
    %112 = arith.truncf %111 : vector<4x512xf32> to vector<4x512xbf16>
    %c20_62 = arith.constant 20 : index
    %c0_63 = arith.constant 0 : index
    %113 = vector.load %arg10[%c20_62, %c0_63] : memref<40x512xbf16, #tpu.memory_space<vmem>>, vector<4x512xbf16>
    tpu.vector_store %arg10[%c20_62, %c0_63], %112 {strides = array<i32>} : memref<40x512xbf16, #tpu.memory_space<vmem>>, vector<4x512xbf16>,
    %c511_i32_64 = arith.constant 511 : i32
    %114 = tpu.dynamic_rotate %84 by %c511_i32_64 dim 1 : vector<4x512xf32>, i32 -> vector<4x512xf32>
    %c5_65 = arith.constant 5 : index
    %c0_66 = arith.constant 0 : index
    %115 = vector.load %arg1[%c5_65, %c0_66] : memref<9x512xf32, #tpu.memory_space<vmem>>, vector<1x512xf32>
    %116 = vector.broadcast %115 : vector<1x512xf32> to vector<4x512xf32>
    %117 = arith.mulf %114, %116 : vector<4x512xf32>
    %118 = arith.truncf %117 : vector<4x512xf32> to vector<4x512xbf16>
    %c24_67 = arith.constant 24 : index
    %c0_68 = arith.constant 0 : index
    %119 = vector.load %arg10[%c24_67, %c0_68] : memref<40x512xbf16, #tpu.memory_space<vmem>>, vector<4x512xbf16>
    tpu.vector_store %arg10[%c24_67, %c0_68], %118 {strides = array<i32>} : memref<40x512xbf16, #tpu.memory_space<vmem>>, vector<4x512xbf16>,
    %c497_i32_69 = arith.constant 497 : i32
    %120 = tpu.dynamic_rotate %84 by %c497_i32_69 dim 1 : vector<4x512xf32>, i32 -> vector<4x512xf32>
    %c6_70 = arith.constant 6 : index
    %c0_71 = arith.constant 0 : index
    %121 = vector.load %arg1[%c6_70, %c0_71] : memref<9x512xf32, #tpu.memory_space<vmem>>, vector<1x512xf32>
    %122 = vector.broadcast %121 : vector<1x512xf32> to vector<4x512xf32>
    %123 = arith.mulf %120, %122 : vector<4x512xf32>
    %124 = arith.truncf %123 : vector<4x512xf32> to vector<4x512xbf16>
    %c28_72 = arith.constant 28 : index
    %c0_73 = arith.constant 0 : index
    %125 = vector.load %arg10[%c28_72, %c0_73] : memref<40x512xbf16, #tpu.memory_space<vmem>>, vector<4x512xbf16>
    tpu.vector_store %arg10[%c28_72, %c0_73], %124 {strides = array<i32>} : memref<40x512xbf16, #tpu.memory_space<vmem>>, vector<4x512xbf16>,
    %c496_i32_74 = arith.constant 496 : i32
    %126 = tpu.dynamic_rotate %84 by %c496_i32_74 dim 1 : vector<4x512xf32>, i32 -> vector<4x512xf32>
    %c7_75 = arith.constant 7 : index
    %c0_76 = arith.constant 0 : index
    %127 = vector.load %arg1[%c7_75, %c0_76] : memref<9x512xf32, #tpu.memory_space<vmem>>, vector<1x512xf32>
    %128 = vector.broadcast %127 : vector<1x512xf32> to vector<4x512xf32>
    %129 = arith.mulf %126, %128 : vector<4x512xf32>
    %130 = arith.truncf %129 : vector<4x512xf32> to vector<4x512xbf16>
    %c32_77 = arith.constant 32 : index
    %c0_78 = arith.constant 0 : index
    %131 = vector.load %arg10[%c32_77, %c0_78] : memref<40x512xbf16, #tpu.memory_space<vmem>>, vector<4x512xbf16>
    tpu.vector_store %arg10[%c32_77, %c0_78], %130 {strides = array<i32>} : memref<40x512xbf16, #tpu.memory_space<vmem>>, vector<4x512xbf16>,
    %c495_i32_79 = arith.constant 495 : i32
    %132 = tpu.dynamic_rotate %84 by %c495_i32_79 dim 1 : vector<4x512xf32>, i32 -> vector<4x512xf32>
    %c8_80 = arith.constant 8 : index
    %c0_81 = arith.constant 0 : index
    %133 = vector.load %arg1[%c8_80, %c0_81] : memref<9x512xf32, #tpu.memory_space<vmem>>, vector<1x512xf32>
    %134 = vector.broadcast %133 : vector<1x512xf32> to vector<4x512xf32>
    %135 = arith.mulf %132, %134 : vector<4x512xf32>
    %136 = arith.truncf %135 : vector<4x512xf32> to vector<4x512xbf16>
    %c36_82 = arith.constant 36 : index
    %c0_83 = arith.constant 0 : index
    %137 = vector.load %arg10[%c36_82, %c0_83] : memref<40x512xbf16, #tpu.memory_space<vmem>>, vector<4x512xbf16>
    tpu.vector_store %arg10[%c36_82, %c0_83], %136 {strides = array<i32>} : memref<40x512xbf16, #tpu.memory_space<vmem>>, vector<4x512xbf16>,
    %c0_84 = arith.constant 0 : index
    %c0_85 = arith.constant 0 : index
    %138 = vector.load %arg6[%c0_84, %c0_85] : memref<16x40xbf16, #tpu.memory_space<vmem>>, vector<16x40xbf16>
    %c0_86 = arith.constant 0 : index
    %c0_87 = arith.constant 0 : index
    %139 = vector.load %arg10[%c0_86, %c0_87] : memref<40x512xbf16, #tpu.memory_space<vmem>>, vector<40x512xbf16>
    %cst_88 = arith.constant dense<0.000000e+00> : vector<16x512xf32>
    %140 = tpu.matmul %138, %139, %cst_88 {dimension_numbers = #tpu.dot_dimension_numbers<[1], [0], [0], [1], [0, 0, 1, 1], [], []>} : vector<16x40xbf16>, vector<40x512xbf16>, vector<16x512xf32> -> vector<16x512xf32>
    %141 = vector.extract_strided_slice %140 {offsets = [0, 0], sizes = [8, 512], strides = [1, 1]} : vector<16x512xf32> to vector<8x512xf32>
    %c0_89 = arith.constant 0 : index
    %c0_90 = arith.constant 0 : index
    %142 = vector.load %arg7[%c0_89, %c0_90] : memref<8x1xf32, #tpu.memory_space<vmem>>, vector<8x1xf32>
    %143 = vector.broadcast %142 : vector<8x1xf32> to vector<8x512xf32>
    %144 = arith.addf %141, %143 : vector<8x512xf32>
    %cst_91 = arith.constant 0.000000e+00 : f32
    %145 = vector.broadcast %cst_91 : f32 to vector<8x512xf32>
    %146 = arith.maximumf %144, %145 : vector<8x512xf32>
    %147 = vector.extract_strided_slice %140 {offsets = [8, 0], sizes = [8, 512], strides = [1, 1]} : vector<16x512xf32> to vector<8x512xf32>
    %148 = arith.addf %146, %147 : vector<8x512xf32>
    %c0_92 = arith.constant 0 : index
    %c0_93 = arith.constant 0 : index
    %149 = vector.load %arg8[%c0_92, %c0_93] : memref<8x1xf32, #tpu.memory_space<vmem>>, vector<8x1xf32>
    %150 = vector.broadcast %149 : vector<8x1xf32> to vector<8x512xf32>
    %151 = arith.addf %148, %150 : vector<8x512xf32>
    %c0_94 = arith.constant 0 : index
    %c0_95 = arith.constant 0 : index
    %152 = vector.load %arg9[%c0_94, %c0_95] : memref<8x512xf32, #tpu.memory_space<vmem>>, vector<8x512xf32>
    tpu.vector_store %arg9[%c0_94, %c0_95], %151 {strides = array<i32>} : memref<8x512xf32, #tpu.memory_space<vmem>>, vector<8x512xf32>,
    return
  }
}

</mosaic_0001>

<llo_original>
// kernel: tpu_custom_call.1
$region0: #{tpu_custom_call.1}
  #allocation0 [shape = 'u32[]', space=smem, size = 0x4, offset = 0x4, fixed_abs, tag = 'smem constant byte address 0x4 - core index']
  #allocation1 [shape = 'u32[72,128]{1,0:T(1,128)}', space=vmem, size = 0x9000, scoped, tag = 'internal scratch']
  #allocation2 [shape = 'bf16[40,512]{1,0:T(8,128)(2,1)}', space=vmem, size = 0xa000, scoped, tag = 'scratch operand']
  %s0 = inlined_call_operand.vmem [shape: f32[4,512], index: 0, kind: input, shape index: {}]
  %s1 = inlined_call_operand.hbm [shape: f32[9,512], index: 1, kind: input, shape index: {}]
  %s2 = inlined_call_operand.vmem [shape: bf16[4,40], index: 2, kind: input, shape index: {}]
  %s3 = inlined_call_operand.vmem [shape: f32[4,1], index: 3, kind: input, shape index: {}]
  %s4 = inlined_call_operand.vmem [shape: f32[4,1], index: 4, kind: input, shape index: {}]
  %s5 = inlined_call_operand.vmem [shape: f32[4,1], index: 5, kind: input, shape index: {}]
  %s6 = inlined_call_operand.hbm [shape: bf16[16,40], index: 6, kind: input, shape index: {}]
  %s7 = inlined_call_operand.vmem [shape: f32[8,1], index: 7, kind: input, shape index: {}]
  %s8 = inlined_call_operand.vmem [shape: f32[8,1], index: 8, kind: input, shape index: {}]
  %s9 = inlined_call_operand.hbm [shape: f32[8,512], index: 9, kind: output, shape index: {}]
  %s10 = sld [smem:[#allocation0]]
  $region54: #{tpu_custom_call.1} parent=0
    _
  %s12 = ssub.s32 1, %s10
  %s13 = scalar_select 0, %s12, %s10
  $region1: #{tpu_custom_call.1} parent=0
    #allocation3 [shape = 'u8[32768]{0}', space=vmem, size = 0x8000, scoped, tag = 'input window, operand 1, single buffered']
    #allocation4 [shape = 's32[1]{0}', space=sflag, size = 0x4, scoped, tag = 'scoped memory for tpu_custom_call.1']
    #allocation5 [shape = 's32[1]{0}', space=sflag, size = 0x4, scoped, tag = 'scoped memory for tpu_custom_call.1']
    #allocation6 [shape = 'u8[4096]{0}', space=vmem, size = 0x1000, scoped, tag = 'input window, operand 6, single buffered']
    #allocation7 [shape = 's32[1]{0}', space=sflag, size = 0x4, scoped, tag = 'scoped memory for tpu_custom_call.1']
    #allocation8 [shape = 'u8[16384]{0}', space=vmem, size = 0x4000, scoped, tag = 'output window, operand 0, single buffered']
    %14 = vsyncpa [#allocation4], 0
    %15 = vsyncpa [#allocation7], 0
    %16 = vsyncpa [#allocation5], 0
    // Predicated region
    $region2: #{tpu_custom_call.1} parent=1 // pred_check
      _
    $region3: #{tpu_custom_call.1} parent=1 // pred_check_branch
      %18 = sbr.rel (0) target = $region5
    $region4: #{tpu_custom_call.1} parent=1 // pred_region
      _
    $region5: #{tpu_custom_call.1} parent=1 // pred_fallthru
      _
    // Predicated region
    $region6: #{tpu_custom_call.1} parent=1 // pred_check
      _
    $region7: #{tpu_custom_call.1} parent=1 // pred_check_branch
      %20 = sbr.rel (0) target = $region9
    $region8: #{tpu_custom_call.1} parent=1 // pred_region
      %22 = vsyncadd [#allocation4], 0
      %s23 = sshll.u32 %s1, 4
      %s24 = int_to_ptr.hbm [resolvable:$true] %s23
      %s25 = sshll.u32 [#allocation3], 4
      %s26 = int_to_ptr.vmem [resolvable:$true] %s25
      %31 = dma.hbm_to_vmem [thread:$0]  %s24, 1024, %s26, [#allocation4], 512, 512, 32
    $region9: #{tpu_custom_call.1} parent=1 // pred_fallthru
      _
    // Predicated region
    $region10: #{tpu_custom_call.1} parent=1 // pred_check
      _
    $region11: #{tpu_custom_call.1} parent=1 // pred_check_branch
      %33 = sbr.rel (0) target = $region13
    $region12: #{tpu_custom_call.1} parent=1 // pred_region
      _
    $region13: #{tpu_custom_call.1} parent=1 // pred_fallthru
      _
    // Predicated region
    $region14: #{tpu_custom_call.1} parent=1 // pred_check
      _
    $region15: #{tpu_custom_call.1} parent=1 // pred_check_branch
      %35 = sbr.rel (0) target = $region17
    $region16: #{tpu_custom_call.1} parent=1 // pred_region
      _
    $region17: #{tpu_custom_call.1} parent=1 // pred_fallthru
      _
    // Predicated region
    $region18: #{tpu_custom_call.1} parent=1 // pred_check
      _
    $region19: #{tpu_custom_call.1} parent=1 // pred_check_branch
      %37 = sbr.rel (0) target = $region21
    $region20: #{tpu_custom_call.1} parent=1 // pred_region
      _
    $region21: #{tpu_custom_call.1} parent=1 // pred_fallthru
      _
    // Predicated region
    $region22: #{tpu_custom_call.1} parent=1 // pred_check
      _
    $region23: #{tpu_custom_call.1} parent=1 // pred_check_branch
      %39 = sbr.rel (0) target = $region25
    $region24: #{tpu_custom_call.1} parent=1 // pred_region
      _
    $region25: #{tpu_custom_call.1} parent=1 // pred_fallthru
      _
    // Predicated region
    $region26: #{tpu_custom_call.1} parent=1 // pred_check
      _
    $region27: #{tpu_custom_call.1} parent=1 // pred_check_branch
      %41 = sbr.rel (0) target = $region29
    $region28: #{tpu_custom_call.1} parent=1 // pred_region
      %43 = vsyncadd [#allocation7], 0
      %s44 = sshll.u32 %s6, 4
      %s45 = int_to_ptr.hbm [resolvable:$true] %s44
      %s46 = sshll.u32 [#allocation6], 4
      %s47 = int_to_ptr.vmem [resolvable:$true] %s46
      %52 = dma.hbm_to_vmem [thread:$0]  %s45, 128, %s47, [#allocation7], 64, 64, 4
    $region29: #{tpu_custom_call.1} parent=1 // pred_fallthru
      _
    // Predicated region
    $region30: #{tpu_custom_call.1} parent=1 // pred_check
      _
    $region31: #{tpu_custom_call.1} parent=1 // pred_check_branch
      %54 = sbr.rel (0) target = $region33
    $region32: #{tpu_custom_call.1} parent=1 // pred_region
      _
    $region33: #{tpu_custom_call.1} parent=1 // pred_fallthru
      _
    // Predicated region
    $region34: #{tpu_custom_call.1} parent=1 // pred_check
      _
    $region35: #{tpu_custom_call.1} parent=1 // pred_check_branch
      %56 = sbr.rel (0) target = $region37
    $region36: #{tpu_custom_call.1} parent=1 // pred_region
      _
    $region37: #{tpu_custom_call.1} parent=1 // pred_fallthru
      _
    // Predicated region
    $region38: #{tpu_custom_call.1} parent=1 // pred_check
      _
    $region39: #{tpu_custom_call.1} parent=1 // pred_check_branch
      %58 = sbr.rel (0) target = $region41
    $region40: #{tpu_custom_call.1} parent=1 // pred_region
      %60 = dma.done [#allocation4], 1024
    $region41: #{tpu_custom_call.1} parent=1 // pred_fallthru
      _
    // Predicated region
    $region42: #{tpu_custom_call.1} parent=1 // pred_check
      _
    $region43: #{tpu_custom_call.1} parent=1 // pred_check_branch
      %62 = sbr.rel (0) target = $region45
    $region44: #{tpu_custom_call.1} parent=1 // pred_region
      %64 = dma.done [#allocation7], 128
    $region45: #{tpu_custom_call.1} parent=1 // pred_fallthru
      _
    %v66 = vld [vmem:[%s0] sm:$0xff]
    %v67 = vld [vmem:[%s0 + $0x8] sm:$0xff]
    %70 = vst [vmem:[#allocation1] ss:$2 sm:$0xff] %v66
    %s71 = scalar_lea.vmem [#allocation1], 16
    %72 = vst [vmem:[%s71] ss:$2 sm:$0xff] %v67
    %v73 = vld.sshfl [vmem:[#allocation1] sm:$0xff pattern:$0x75316420]
    %v74 = vld.sshfl [vmem:[#allocation1 + $0x8] sm:$0xff pattern:$0x75316420]
    %v75 = vld.sshfl [vmem:[#allocation1 + $0x10] sm:$0xff pattern:$0x75316420]
    %v76 = vld.sshfl [vmem:[#allocation1 + $0x18] sm:$0xff pattern:$0x75316420]
    %v81 = vpack.c.bf16 %v74, %v73
    %v82 = vpack.c.bf16 %v76, %v75
    %83 = vst [vmem:[#allocation2] sm:$0x33] %v81
    %84 = vst [vmem:[#allocation2 + $0x8] sm:$0x33] %v82
    %85 = vst [vmem:[#allocation1] ss:$2 sm:$0xff] %v66
    %s86 = scalar_lea.vmem [#allocation1], 16
    %87 = vst [vmem:[%s86] ss:$2 sm:$0xff] %v67
    %v88 = vld.sshfl [vmem:[#allocation1] sm:$0xff pattern:$0x75316420]
    %v89 = vld.sshfl [vmem:[#allocation1 + $0x8] sm:$0xff pattern:$0x75316420]
    %v90 = vld.sshfl [vmem:[#allocation1 + $0x10] sm:$0xff pattern:$0x75316420]
    %v91 = vld.sshfl [vmem:[#allocation1 + $0x18] sm:$0xff pattern:$0x75316420]
    %96 = vrot.lane.b32.xlu0 %v88, 17
    %v97 = vpop.permute.xlu0 %96
    %98 = vrot.lane.b32.xlu0 %v89, 17
    %v99 = vpop.permute.xlu0 %98
    %100 = vrot.lane.b32.xlu0 %v90, 17
    %v101 = vpop.permute.xlu0 %100
    %102 = vrot.lane.b32.xlu0 %v91, 17
    %v103 = vpop.permute.xlu0 %102
    %v104 = vlaneseq
    %v105 = vand.u32 %v104, 127
    %vm106 = vcmp.lt.s32.totalorder %v105, 17
    %v107 = vsel %vm106, %v101, %v103
    %v108 = vsel %vm106, %v99, %v101
    %v109 = vsel %vm106, %v97, %v99
    %v110 = vsel %vm106, %v103, %v97
    %v111 = vld [vmem:[#allocation3] ss:$8 sm:$0xf]
    %v113 = vperm.slane %v111, 0
    %v114 = vperm.slane %v111, 1
    %v115 = vperm.slane %v111, 2
    %v116 = vperm.slane %v111, 3
    %v121 = vmul.f32 %v110, %v113
    %v122 = vmul.f32 %v109, %v114
    %v123 = vmul.f32 %v108, %v115
    %v124 = vmul.f32 %v107, %v116
    %v125 = vpack.c.bf16 %v122, %v121
    %v126 = vpack.c.bf16 %v124, %v123
    %v129 = vrot.slane %v125, 6
    %v130 = vrot.slane %v126, 6
    %133 = vst [vmem:[#allocation2] sm:$0xcc] %v129
    %134 = vst [vmem:[#allocation2 + $0x8] sm:$0xcc] %v130
    %135 = vst [vmem:[#allocation1] ss:$2 sm:$0xff] %v66
    %s136 = scalar_lea.vmem [#allocation1], 16
    %137 = vst [vmem:[%s136] ss:$2 sm:$0xff] %v67
    %v138 = vld.sshfl [vmem:[#allocation1] sm:$0xff pattern:$0x75316420]
    %v139 = vld.sshfl [vmem:[#allocation1 + $0x8] sm:$0xff pattern:$0x75316420]
    %v140 = vld.sshfl [vmem:[#allocation1 + $0x10] sm:$0xff pattern:$0x75316420]
    %v141 = vld.sshfl [vmem:[#allocation1 + $0x18] sm:$0xff pattern:$0x75316420]
    %146 = vrot.lane.b32.xlu0 %v138, 16
    %v147 = vpop.permute.xlu0 %146
    %148 = vrot.lane.b32.xlu0 %v139, 16
    %v149 = vpop.permute.xlu0 %148
    %150 = vrot.lane.b32.xlu0 %v140, 16
    %v151 = vpop.permute.xlu0 %150
    %152 = vrot.lane.b32.xlu0 %v141, 16
    %v153 = vpop.permute.xlu0 %152
    %vm154 = vcmp.lt.s32.totalorder %v105, 16
    %v155 = vsel %vm154, %v151, %v153
    %v156 = vsel %vm154, %v149, %v151
    %v157 = vsel %vm154, %v147, %v149
    %v158 = vsel %vm154, %v153, %v147
    %s159 = scalar_lea.vmem [#allocation3], 1
    %v160 = vld [vmem:[%s159] ss:$8 sm:$0xf]
    %v162 = vperm.slane %v160, 0
    %v163 = vperm.slane %v160, 1
    %v164 = vperm.slane %v160, 2
    %v165 = vperm.slane %v160, 3
    %v170 = vmul.f32 %v158, %v162
    %v171 = vmul.f32 %v157, %v163
    %v172 = vmul.f32 %v156, %v164
    %v173 = vmul.f32 %v155, %v165
    %v174 = vpack.c.bf16 %v171, %v170
    %v175 = vpack.c.bf16 %v173, %v172
    %176 = vst [vmem:[#allocation2 + $0x10] sm:$0x33] %v174
    %177 = vst [vmem:[#allocation2 + $0x18] sm:$0x33] %v175
    %178 = vst [vmem:[#allocation1] ss:$2 sm:$0xff] %v66
    %s179 = scalar_lea.vmem [#allocation1], 16
    %180 = vst [vmem:[%s179] ss:$2 sm:$0xff] %v67
    %v181 = vld.sshfl [vmem:[#allocation1] sm:$0xff pattern:$0x75316420]
    %v182 = vld.sshfl [vmem:[#allocation1 + $0x8] sm:$0xff pattern:$0x75316420]
    %v183 = vld.sshfl [vmem:[#allocation1 + $0x10] sm:$0xff pattern:$0x75316420]
    %v184 = vld.sshfl [vmem:[#allocation1 + $0x18] sm:$0xff pattern:$0x75316420]
    %189 = vrot.lane.b32.xlu0 %v181, 15
    %v190 = vpop.permute.xlu0 %189
    %191 = vrot.lane.b32.xlu0 %v182, 15
    %v192 = vpop.permute.xlu0 %191
    %193 = vrot.lane.b32.xlu0 %v183, 15
    %v194 = vpop.permute.xlu0 %193
    %195 = vrot.lane.b32.xlu0 %v184, 15
    %v196 = vpop.permute.xlu0 %195
    %vm197 = vcmp.lt.s32.totalorder %v105, 15
    %v198 = vsel %vm197, %v194, %v196
    %v199 = vsel %vm197, %v192, %v194
    %v200 = vsel %vm197, %v190, %v192
    %v201 = vsel %vm197, %v196, %v190
    %s202 = scalar_lea.vmem [#allocation3], 2
    %v203 = vld [vmem:[%s202] ss:$8 sm:$0xf]
    %v205 = vperm.slane %v203, 0
    %v206 = vperm.slane %v203, 1
    %v207 = vperm.slane %v203, 2
    %v208 = vperm.slane %v203, 3
    %v213 = vmul.f32 %v201, %v205
    %v214 = vmul.f32 %v200, %v206
    %v215 = vmul.f32 %v199, %v207
    %v216 = vmul.f32 %v198, %v208
    %v217 = vpack.c.bf16 %v214, %v213
    %v218 = vpack.c.bf16 %v216, %v215
    %v221 = vrot.slane %v217, 6
    %v222 = vrot.slane %v218, 6
    %225 = vst [vmem:[#allocation2 + $0x10] sm:$0xcc] %v221
    %226 = vst [vmem:[#allocation2 + $0x18] sm:$0xcc] %v222
    %227 = vst [vmem:[#allocation1] ss:$2 sm:$0xff] %v66
    %s228 = scalar_lea.vmem [#allocation1], 16
    %229 = vst [vmem:[%s228] ss:$2 sm:$0xff] %v67
    %v230 = vld.sshfl [vmem:[#allocation1] sm:$0xff pattern:$0x75316420]
    %v231 = vld.sshfl [vmem:[#allocation1 + $0x8] sm:$0xff pattern:$0x75316420]
    %v232 = vld.sshfl [vmem:[#allocation1 + $0x10] sm:$0xff pattern:$0x75316420]
    %v233 = vld.sshfl [vmem:[#allocation1 + $0x18] sm:$0xff pattern:$0x75316420]
    %238 = vrot.lane.b32.xlu0 %v230, 1
    %v239 = vpop.permute.xlu0 %238
    %240 = vrot.lane.b32.xlu0 %v231, 1
    %v241 = vpop.permute.xlu0 %240
    %242 = vrot.lane.b32.xlu0 %v232, 1
    %v243 = vpop.permute.xlu0 %242
    %244 = vrot.lane.b32.xlu0 %v233, 1
    %v245 = vpop.permute.xlu0 %244
    %vm246 = vcmp.lt.s32.totalorder %v105, 1
    %v247 = vsel %vm246, %v243, %v245
    %v248 = vsel %vm246, %v241, %v243
    %v249 = vsel %vm246, %v239, %v241
    %v250 = vsel %vm246, %v245, %v239
    %s251 = scalar_lea.vmem [#allocation3], 3
    %v252 = vld [vmem:[%s251] ss:$8 sm:$0xf]
    %v254 = vperm.slane %v252, 0
    %v255 = vperm.slane %v252, 1
    %v256 = vperm.slane %v252, 2
    %v257 = vperm.slane %v252, 3
    %v262 = vmul.f32 %v250, %v254
    %v263 = vmul.f32 %v249, %v255
    %v264 = vmul.f32 %v248, %v256
    %v265 = vmul.f32 %v247, %v257
    %v266 = vpack.c.bf16 %v263, %v262
    %v267 = vpack.c.bf16 %v265, %v264
    %268 = vst [vmem:[#allocation2 + $0x20] sm:$0x33] %v266
    %269 = vst [vmem:[#allocation2 + $0x28] sm:$0x33] %v267
    %s270 = scalar_lea.vmem [#allocation3], 4
    %v271 = vld [vmem:[%s270] ss:$8 sm:$0xf]
    %v273 = vperm.slane %v271, 0
    %v274 = vperm.slane %v271, 1
    %v275 = vperm.slane %v271, 2
    %v276 = vperm.slane %v271, 3
    %v277 = vrot.slane %v274, 4
    %v278 = vrot.slane %v276, 4
    %vm279 = vcmask 1043456
    %v280 = vsel %vm279, %v273, %v277
    %v281 = vsel %vm279, %v275, %v278
    %v284 = vmul.f32 %v66, %v280
    %v285 = vmul.f32 %v67, %v281
    %288 = vst [vmem:[#allocation1] ss:$2 sm:$0xff] %v284
    %s289 = scalar_lea.vmem [#allocation1], 16
    %290 = vst [vmem:[%s289] ss:$2 sm:$0xff] %v285
    %v291 = vld.sshfl [vmem:[#allocation1] sm:$0xff pattern:$0x75316420]
    %v292 = vld.sshfl [vmem:[#allocation1 + $0x8] sm:$0xff pattern:$0x75316420]
    %v293 = vld.sshfl [vmem:[#allocation1 + $0x10] sm:$0xff pattern:$0x75316420]
    %v294 = vld.sshfl [vmem:[#allocation1 + $0x18] sm:$0xff pattern:$0x75316420]
    %v299 = vpack.c.bf16 %v292, %v291
    %v300 = vpack.c.bf16 %v294, %v293
    %v303 = vrot.slane %v299, 6
    %v304 = vrot.slane %v300, 6
    %307 = vst [vmem:[#allocation2 + $0x20] sm:$0xcc] %v303
    %308 = vst [vmem:[#allocation2 + $0x28] sm:$0xcc] %v304
    %309 = vst [vmem:[#allocation1] ss:$2 sm:$0xff] %v66
    %s310 = scalar_lea.vmem [#allocation1], 16
    %311 = vst [vmem:[%s310] ss:$2 sm:$0xff] %v67
    %v312 = vld.sshfl [vmem:[#allocation1] sm:$0xff pattern:$0x75316420]
    %v313 = vld.sshfl [vmem:[#allocation1 + $0x8] sm:$0xff pattern:$0x75316420]
    %v314 = vld.sshfl [vmem:[#allocation1 + $0x10] sm:$0xff pattern:$0x75316420]
    %v315 = vld.sshfl [vmem:[#allocation1 + $0x18] sm:$0xff pattern:$0x75316420]
    %320 = vrot.lane.b32.xlu0 %v312, 127
    %v321 = vpop.permute.xlu0 %320
    %322 = vrot.lane.b32.xlu0 %v313, 127
    %v323 = vpop.permute.xlu0 %322
    %324 = vrot.lane.b32.xlu0 %v314, 127
    %v325 = vpop.permute.xlu0 %324
    %326 = vrot.lane.b32.xlu0 %v315, 127
    %v327 = vpop.permute.xlu0 %326
    %vm328 = vcmp.lt.s32.totalorder %v105, 127
    %v329 = vsel %vm328, %v325, %v327
    %v330 = vsel %vm328, %v323, %v325
    %v331 = vsel %vm328, %v321, %v323
    %v332 = vsel %vm328, %v327, %v321
    %s333 = scalar_lea.vmem [#allocation3], 5
    %v334 = vld [vmem:[%s333] ss:$8 sm:$0xf]
    %v336 = vperm.slane %v334, 0
    %v337 = vperm.slane %v334, 1
    %v338 = vperm.slane %v334, 2
    %v339 = vperm.slane %v334, 3
    %v344 = vmul.f32 %v331, %v336
    %v345 = vmul.f32 %v330, %v337
    %v346 = vmul.f32 %v329, %v338
    %v347 = vmul.f32 %v332, %v339
    %v348 = vpack.c.bf16 %v345, %v344
    %v349 = vpack.c.bf16 %v347, %v346
    %350 = vst [vmem:[#allocation2 + $0x30] sm:$0x33] %v348
    %351 = vst [vmem:[#allocation2 + $0x38] sm:$0x33] %v349
    %352 = vst [vmem:[#allocation1] ss:$2 sm:$0xff] %v66
    %s353 = scalar_lea.vmem [#allocation1], 16
    %354 = vst [vmem:[%s353] ss:$2 sm:$0xff] %v67
    %v355 = vld.sshfl [vmem:[#allocation1] sm:$0xff pattern:$0x75316420]
    %v356 = vld.sshfl [vmem:[#allocation1 + $0x8] sm:$0xff pattern:$0x75316420]
    %v357 = vld.sshfl [vmem:[#allocation1 + $0x10] sm:$0xff pattern:$0x75316420]
    %v358 = vld.sshfl [vmem:[#allocation1 + $0x18] sm:$0xff pattern:$0x75316420]
    %363 = vrot.lane.b32.xlu0 %v355, 113
    %v364 = vpop.permute.xlu0 %363
    %365 = vrot.lane.b32.xlu0 %v356, 113
    %v366 = vpop.permute.xlu0 %365
    %367 = vrot.lane.b32.xlu0 %v357, 113
    %v368 = vpop.permute.xlu0 %367
    %369 = vrot.lane.b32.xlu0 %v358, 113
    %v370 = vpop.permute.xlu0 %369
    %vm371 = vcmp.lt.s32.totalorder %v105, 113
    %v372 = vsel %vm371, %v368, %v370
    %v373 = vsel %vm371, %v366, %v368
    %v374 = vsel %vm371, %v364, %v366
    %v375 = vsel %vm371, %v370, %v364
    %s376 = scalar_lea.vmem [#allocation3], 6
    %v377 = vld [vmem:[%s376] ss:$8 sm:$0xf]
    %v379 = vperm.slane %v377, 0
    %v380 = vperm.slane %v377, 1
    %v381 = vperm.slane %v377, 2
    %v382 = vperm.slane %v377, 3
    %v387 = vmul.f32 %v374, %v379
    %v388 = vmul.f32 %v373, %v380
    %v389 = vmul.f32 %v372, %v381
    %v390 = vmul.f32 %v375, %v382
    %v391 = vpack.c.bf16 %v388, %v387
    %v392 = vpack.c.bf16 %v390, %v389
    %v395 = vrot.slane %v391, 6
    %v396 = vrot.slane %v392, 6
    %399 = vst [vmem:[#allocation2 + $0x30] sm:$0xcc] %v395
    %400 = vst [vmem:[#allocation2 + $0x38] sm:$0xcc] %v396
    %401 = vst [vmem:[#allocation1] ss:$2 sm:$0xff] %v66
    %s402 = scalar_lea.vmem [#allocation1], 16
    %403 = vst [vmem:[%s402] ss:$2 sm:$0xff] %v67
    %v404 = vld.sshfl [vmem:[#allocation1] sm:$0xff pattern:$0x75316420]
    %v405 = vld.sshfl [vmem:[#allocation1 + $0x8] sm:$0xff pattern:$0x75316420]
    %v406 = vld.sshfl [vmem:[#allocation1 + $0x10] sm:$0xff pattern:$0x75316420]
    %v407 = vld.sshfl [vmem:[#allocation1 + $0x18] sm:$0xff pattern:$0x75316420]
    %412 = vrot.lane.b32.xlu0 %v404, 112
    %v413 = vpop.permute.xlu0 %412
    %414 = vrot.lane.b32.xlu0 %v405, 112
    %v415 = vpop.permute.xlu0 %414
    %416 = vrot.lane.b32.xlu0 %v406, 112
    %v417 = vpop.permute.xlu0 %416
    %418 = vrot.lane.b32.xlu0 %v407, 112
    %v419 = vpop.permute.xlu0 %418
    %vm420 = vcmp.lt.s32.totalorder %v105, 112
    %v421 = vsel %vm420, %v417, %v419
    %v422 = vsel %vm420, %v415, %v417
    %v423 = vsel %vm420, %v413, %v415
    %v424 = vsel %vm420, %v419, %v413
    %s425 = scalar_lea.vmem [#allocation3], 7
    %v426 = vld [vmem:[%s425] ss:$8 sm:$0xf]
    %v428 = vperm.slane %v426, 0
    %v429 = vperm.slane %v426, 1
    %v430 = vperm.slane %v426, 2
    %v431 = vperm.slane %v426, 3
    %v436 = vmul.f32 %v423, %v428
    %v437 = vmul.f32 %v422, %v429
    %v438 = vmul.f32 %v421, %v430
    %v439 = vmul.f32 %v424, %v431
    %v440 = vpack.c.bf16 %v437, %v436
    %v441 = vpack.c.bf16 %v439, %v438
    %442 = vst [vmem:[#allocation2 + $0x40] sm:$0x33] %v440
    %443 = vst [vmem:[#allocation2 + $0x48] sm:$0x33] %v441
    %444 = vst [vmem:[#allocation1] ss:$2 sm:$0xff] %v66
    %s445 = scalar_lea.vmem [#allocation1], 16
    %446 = vst [vmem:[%s445] ss:$2 sm:$0xff] %v67
    %v447 = vld.sshfl [vmem:[#allocation1] sm:$0xff pattern:$0x75316420]
    %v448 = vld.sshfl [vmem:[#allocation1 + $0x8] sm:$0xff pattern:$0x75316420]
    %v449 = vld.sshfl [vmem:[#allocation1 + $0x10] sm:$0xff pattern:$0x75316420]
    %v450 = vld.sshfl [vmem:[#allocation1 + $0x18] sm:$0xff pattern:$0x75316420]
    %455 = vrot.lane.b32.xlu0 %v447, 111
    %v456 = vpop.permute.xlu0 %455
    %457 = vrot.lane.b32.xlu0 %v448, 111
    %v458 = vpop.permute.xlu0 %457
    %459 = vrot.lane.b32.xlu0 %v449, 111
    %v460 = vpop.permute.xlu0 %459
    %461 = vrot.lane.b32.xlu0 %v450, 111
    %v462 = vpop.permute.xlu0 %461
    %vm463 = vcmp.lt.s32.totalorder %v105, 111
    %v464 = vsel %vm463, %v460, %v462
    %v465 = vsel %vm463, %v458, %v460
    %v466 = vsel %vm463, %v456, %v458
    %v467 = vsel %vm463, %v462, %v456
    %s468 = scalar_lea.vmem [#allocation3], 32
    %v469 = vld [vmem:[%s468] ss:$8 sm:$0xf]
    %v471 = vperm.slane %v469, 0
    %v472 = vperm.slane %v469, 1
    %v473 = vperm.slane %v469, 2
    %v474 = vperm.slane %v469, 3
    %v479 = vmul.f32 %v466, %v471
    %v480 = vmul.f32 %v465, %v472
    %v481 = vmul.f32 %v464, %v473
    %v482 = vmul.f32 %v467, %v474
    %v483 = vpack.c.bf16 %v480, %v479
    %v484 = vpack.c.bf16 %v482, %v481
    %v487 = vrot.slane %v483, 6
    %v488 = vrot.slane %v484, 6
    %491 = vst [vmem:[#allocation2 + $0x40] sm:$0xcc] %v487
    %492 = vst [vmem:[#allocation2 + $0x48] sm:$0xcc] %v488
    %v493 = vld [vmem:[%s2] sm:$0x3]
    %v494 = vld [vmem:[#allocation2] sm:$0xff]
    %v495 = vld [vmem:[#allocation2 + $0x8] sm:$0xff]
    %v496 = vld [vmem:[#allocation2 + $0x10] sm:$0xff]
    %v497 = vld [vmem:[#allocation2 + $0x18] sm:$0xff]
    %v498 = vld [vmem:[#allocation2 + $0x20] sm:$0xff]
    %v499 = vld [vmem:[#allocation2 + $0x28] sm:$0xff]
    %v500 = vld [vmem:[#allocation2 + $0x30] sm:$0xff]
    %v501 = vld [vmem:[#allocation2 + $0x38] sm:$0xff]
    %v502 = vld [vmem:[#allocation2 + $0x40] sm:$0xff]
    %v503 = vld [vmem:[#allocation2 + $0x48] sm:$0xff]
    %v504 = vld [vmem:[%s3] sm:$0xf]
    %506 = vset.pattern.permute.xlu0 0
    %507 = vperm.xlu0 %506, %v504
    %v508 = vpop.permute.xlu0 %507
    %v520 = vunpack.c.l.b16 %v494
    %v521 = vunpack.c.h.b16 %v494
    %v522 = vunpack.c.l.b16 %v495
    %v523 = vunpack.c.h.b16 %v495
    %v524 = vunpack.c.l.b16 %v496
    %v525 = vunpack.c.h.b16 %v496
    %v526 = vunpack.c.l.b16 %v497
    %v527 = vunpack.c.h.b16 %v497
    %v528 = vunpack.c.l.b16 %v498
    %v529 = vunpack.c.h.b16 %v498
    %v530 = vunpack.c.l.b16 %v499
    %v531 = vunpack.c.h.b16 %v499
    %v532 = vunpack.c.l.b16 %v500
    %v533 = vunpack.c.h.b16 %v500
    %v534 = vunpack.c.l.b16 %v501
    %v535 = vunpack.c.h.b16 %v501
    %v536 = vunpack.c.l.b16 %v502
    %v537 = vunpack.c.h.b16 %v502
    %v538 = vunpack.c.l.b16 %v503
    %v539 = vunpack.c.h.b16 %v503
    %v540 = vpack.c.b16 %v524, %v520
    %v541 = vpack.c.b16 %v525, %v521
    %v542 = vpack.c.b16 %v526, %v522
    %v543 = vpack.c.b16 %v527, %v523
    %v544 = vpack.c.b16 %v532, %v528
    %v545 = vpack.c.b16 %v533, %v529
    %v546 = vpack.c.b16 %v534, %v530
    %v547 = vpack.c.b16 %v535, %v531
    %v548 = vpack.c.b16 %v536, %v536
    %v549 = vpack.c.b16 %v537, %v537
    %v550 = vpack.c.b16 %v538, %v538
    %v551 = vpack.c.b16 %v539, %v539
    %vm560 = vcmask 326656
    %v562 = vsel %vm560, %v493, 0
    %v565 = vsel %vm279, %v548, 0
    %v568 = vsel %vm279, %v549, 0
    %v571 = vsel %vm279, %v550, 0
    %v574 = vsel %vm279, %v551, 0
    %576 = vmatpush.bf16.msra.mxu0 0
    %577 = vmatpush.bf16.msra.mxu0 0
    %578 = vmatpush.bf16.msra.mxu0 0
    %579 = vmatpush.bf16.msra.mxu0 0
    %580 = vmatpush.bf16.msra.mxu0 0
    %581 = vmatpush.bf16.msra.mxu0 %v565
    %582 = vmatpush.bf16.msra.mxu0 %v544
    %583 = vmatpush.bf16.msra.mxu0 %v540
    %584 = vmatmul.bf16.gmra.mxu0 %v562
    %v585 = vpop.f32.mrf.mxu0
    %v586 = vadd.f32 %v508, %v585
    %v587 = vpop.f32.mrf.mxu0
    %588 = vdwg.mxu0
    %589 = vmatpush.bf16.msra.mxu0 0
    %590 = vmatpush.bf16.msra.mxu0 0
    %591 = vmatpush.bf16.msra.mxu0 0
    %592 = vmatpush.bf16.msra.mxu0 0
    %593 = vmatpush.bf16.msra.mxu0 0
    %594 = vmatpush.bf16.msra.mxu0 %v568
    %595 = vmatpush.bf16.msra.mxu0 %v545
    %596 = vmatpush.bf16.msra.mxu0 %v541
    %597 = vmatmul.bf16.gmra.mxu0 %v562
    %v598 = vpop.f32.mrf.mxu0
    %v599 = vadd.f32 %v508, %v598
    %v600 = vpop.f32.mrf.mxu0
    %601 = vdwg.mxu0
    %602 = vmatpush.bf16.msra.mxu0 0
    %603 = vmatpush.bf16.msra.mxu0 0
    %604 = vmatpush.bf16.msra.mxu0 0
    %605 = vmatpush.bf16.msra.mxu0 0
    %606 = vmatpush.bf16.msra.mxu0 0
    %607 = vmatpush.bf16.msra.mxu0 %v571
    %608 = vmatpush.bf16.msra.mxu0 %v546
    %609 = vmatpush.bf16.msra.mxu0 %v542
    %610 = vmatmul.bf16.gmra.mxu0 %v562
    %v611 = vpop.f32.mrf.mxu0
    %v612 = vadd.f32 %v508, %v611
    %v613 = vpop.f32.mrf.mxu0
    %614 = vdwg.mxu0
    %615 = vmatpush.bf16.msra.mxu0 0
    %616 = vmatpush.bf16.msra.mxu0 0
    %617 = vmatpush.bf16.msra.mxu0 0
    %618 = vmatpush.bf16.msra.mxu0 0
    %619 = vmatpush.bf16.msra.mxu0 0
    %620 = vmatpush.bf16.msra.mxu0 %v574
    %621 = vmatpush.bf16.msra.mxu0 %v547
    %622 = vmatpush.bf16.msra.mxu0 %v543
    %623 = vmatmul.bf16.gmra.mxu0 %v562
    %v624 = vpop.f32.mrf.mxu0
    %v625 = vadd.f32 %v508, %v624
    %v626 = vpop.f32.mrf.mxu0
    %627 = vdwg.mxu0
    %v628 = vmax.f32 %v586, 0.0
    %v629 = vmax.f32 %v599, 0.0
    %v630 = vmax.f32 %v612, 0.0
    %v631 = vmax.f32 %v625, 0.0
    %v632 = vsel %vm279, %v628, 0.0
    %v633 = vsel %vm279, %v629, 0.0
    %v634 = vadd.f32 %v632, %v633
    %v635 = vsel %vm279, %v630, 0.0
    %v636 = vadd.f32 %v634, %v635
    %v637 = vsel %vm279, %v631, 0.0
    %v638 = vadd.f32 %v636, %v637
    %639 = vadd.xlane.f32.xlu0 %v638
    %v640 = vpop.xlane.xlu0 %639
    %v641 = vmul.f32 %v640, 0.001953125
    %v642 = vsub.f32 %v628, %v641
    %v643 = vsub.f32 %v629, %v641
    %v644 = vsub.f32 %v630, %v641
    %v645 = vsub.f32 %v631, %v641
    %v646 = vmul.f32 %v642, %v642
    %v647 = vmul.f32 %v643, %v643
    %v648 = vmul.f32 %v644, %v644
    %v649 = vmul.f32 %v645, %v645
    %v650 = vsel %vm279, %v646, 0.0
    %v651 = vsel %vm279, %v647, 0.0
    %v652 = vadd.f32 %v650, %v651
    %v653 = vsel %vm279, %v648, 0.0
    %v654 = vadd.f32 %v652, %v653
    %v655 = vsel %vm279, %v649, 0.0
    %v656 = vadd.f32 %v654, %v655
    %657 = vadd.xlane.f32.xlu0 %v656
    %v658 = vpop.xlane.xlu0 %657
    %v659 = vmul.f32 %v658, 0.001953125
    %v660 = vld [vmem:[%s4] sm:$0xf]
    %v661 = vadd.f32 %v659, 1e-05
    %v662 = vrsqrt.pop %v661
    %v663 = vmul.f32 %v662, %v661
    %v664 = vmul.f32 %v663, %v662
    %v665 = vmul.f32 0.5, %v664
    %v666 = vsub.f32 1.5, %v665
    %v667 = vmul.f32 %v662, %v666
    %vm668 = vweird.f32 %v661
    %vm669 = vweird.f32 %v662
    %vm670 = vmor %vm668, %vm669
    %v671 = vsel %vm670, %v662, %v667
    %v672 = vmul.f32 %v660, %v671
    %674 = vset.pattern.permute.xlu0 0
    %675 = vperm.xlu0 %674, %v672
    %v676 = vpop.permute.xlu0 %675
    %v678 = vmul.f32 %v642, %v676
    %v679 = vmul.f32 %v643, %v676
    %v680 = vmul.f32 %v644, %v676
    %v681 = vmul.f32 %v645, %v676
    %v682 = vld [vmem:[%s5] sm:$0xf]
    %684 = vset.pattern.permute.xlu0 0
    %685 = vperm.xlu0 %684, %v682
    %v686 = vpop.permute.xlu0 %685
    %v688 = vadd.f32 %v678, %v686
    %v689 = vadd.f32 %v679, %v686
    %v690 = vadd.f32 %v680, %v686
    %v691 = vadd.f32 %v681, %v686
    %692 = vrot.lane.b32.xlu0 %v688, 17
    %v693 = vpop.permute.xlu0 %692
    %694 = vrot.lane.b32.xlu0 %v689, 17
    %v695 = vpop.permute.xlu0 %694
    %696 = vrot.lane.b32.xlu0 %v690, 17
    %v697 = vpop.permute.xlu0 %696
    %698 = vrot.lane.b32.xlu0 %v691, 17
    %v699 = vpop.permute.xlu0 %698
    %v700 = vsel %vm106, %v697, %v699
    %v701 = vsel %vm106, %v695, %v697
    %v702 = vsel %vm106, %v693, %v695
    %v703 = vsel %vm106, %v699, %v693
    %v704 = vld [vmem:[#allocation3] ss:$8 sm:$0xf]
    %v706 = vperm.slane %v704, 0
    %v707 = vperm.slane %v704, 1
    %v708 = vperm.slane %v704, 2
    %v709 = vperm.slane %v704, 3
    %v714 = vmul.f32 %v703, %v706
    %v715 = vmul.f32 %v702, %v707
    %v716 = vmul.f32 %v701, %v708
    %v717 = vmul.f32 %v700, %v709
    %v718 = vpack.c.bf16 %v715, %v714
    %v719 = vpack.c.bf16 %v717, %v716
    %v722 = vrot.slane %v718, 6
    %v723 = vrot.slane %v719, 6
    %726 = vst [vmem:[#allocation2] sm:$0xcc] %v722
    %727 = vst [vmem:[#allocation2 + $0x8] sm:$0xcc] %v723
    %728 = vrot.lane.b32.xlu0 %v688, 16
    %v729 = vpop.permute.xlu0 %728
    %730 = vrot.lane.b32.xlu0 %v689, 16
    %v731 = vpop.permute.xlu0 %730
    %732 = vrot.lane.b32.xlu0 %v690, 16
    %v733 = vpop.permute.xlu0 %732
    %734 = vrot.lane.b32.xlu0 %v691, 16
    %v735 = vpop.permute.xlu0 %734
    %v736 = vsel %vm154, %v733, %v735
    %v737 = vsel %vm154, %v731, %v733
    %v738 = vsel %vm154, %v729, %v731
    %v739 = vsel %vm154, %v735, %v729
    %v740 = vld [vmem:[%s159] ss:$8 sm:$0xf]
    %v742 = vperm.slane %v740, 0
    %v743 = vperm.slane %v740, 1
    %v744 = vperm.slane %v740, 2
    %v745 = vperm.slane %v740, 3
    %v750 = vmul.f32 %v739, %v742
    %v751 = vmul.f32 %v738, %v743
    %v752 = vmul.f32 %v737, %v744
    %v753 = vmul.f32 %v736, %v745
    %v754 = vpack.c.bf16 %v751, %v750
    %v755 = vpack.c.bf16 %v753, %v752
    %756 = vst [vmem:[#allocation2 + $0x10] sm:$0x33] %v754
    %757 = vst [vmem:[#allocation2 + $0x18] sm:$0x33] %v755
    %758 = vrot.lane.b32.xlu0 %v688, 15
    %v759 = vpop.permute.xlu0 %758
    %760 = vrot.lane.b32.xlu0 %v689, 15
    %v761 = vpop.permute.xlu0 %760
    %762 = vrot.lane.b32.xlu0 %v690, 15
    %v763 = vpop.permute.xlu0 %762
    %764 = vrot.lane.b32.xlu0 %v691, 15
    %v765 = vpop.permute.xlu0 %764
    %v766 = vsel %vm197, %v763, %v765
    %v767 = vsel %vm197, %v761, %v763
    %v768 = vsel %vm197, %v759, %v761
    %v769 = vsel %vm197, %v765, %v759
    %v770 = vld [vmem:[%s202] ss:$8 sm:$0xf]
    %v772 = vperm.slane %v770, 0
    %v773 = vperm.slane %v770, 1
    %v774 = vperm.slane %v770, 2
    %v775 = vperm.slane %v770, 3
    %v780 = vmul.f32 %v769, %v772
    %v781 = vmul.f32 %v768, %v773
    %v782 = vmul.f32 %v767, %v774
    %v783 = vmul.f32 %v766, %v775
    %v784 = vpack.c.bf16 %v781, %v780
    %v785 = vpack.c.bf16 %v783, %v782
    %v788 = vrot.slane %v784, 6
    %v789 = vrot.slane %v785, 6
    %792 = vst [vmem:[#allocation2 + $0x10] sm:$0xcc] %v788
    %793 = vst [vmem:[#allocation2 + $0x18] sm:$0xcc] %v789
    %794 = vrot.lane.b32.xlu0 %v688, 1
    %v795 = vpop.permute.xlu0 %794
    %796 = vrot.lane.b32.xlu0 %v689, 1
    %v797 = vpop.permute.xlu0 %796
    %798 = vrot.lane.b32.xlu0 %v690, 1
    %v799 = vpop.permute.xlu0 %798
    %800 = vrot.lane.b32.xlu0 %v691, 1
    %v801 = vpop.permute.xlu0 %800
    %v802 = vsel %vm246, %v799, %v801
    %v803 = vsel %vm246, %v797, %v799
    %v804 = vsel %vm246, %v795, %v797
    %v805 = vsel %vm246, %v801, %v795
    %v806 = vld [vmem:[%s251] ss:$8 sm:$0xf]
    %v808 = vperm.slane %v806, 0
    %v809 = vperm.slane %v806, 1
    %v810 = vperm.slane %v806, 2
    %v811 = vperm.slane %v806, 3
    %v816 = vmul.f32 %v805, %v808
    %v817 = vmul.f32 %v804, %v809
    %v818 = vmul.f32 %v803, %v810
    %v819 = vmul.f32 %v802, %v811
    %v820 = vpack.c.bf16 %v817, %v816
    %v821 = vpack.c.bf16 %v819, %v818
    %822 = vst [vmem:[#allocation2 + $0x20] sm:$0x33] %v820
    %823 = vst [vmem:[#allocation2 + $0x28] sm:$0x33] %v821
    %v824 = vld [vmem:[%s270] ss:$8 sm:$0xf]
    %v826 = vperm.slane %v824, 0
    %v827 = vperm.slane %v824, 1
    %v828 = vperm.slane %v824, 2
    %v829 = vperm.slane %v824, 3
    %v834 = vmul.f32 %v688, %v826
    %v835 = vmul.f32 %v689, %v827
    %v836 = vmul.f32 %v690, %v828
    %v837 = vmul.f32 %v691, %v829
    %v838 = vpack.c.bf16 %v835, %v834
    %v839 = vpack.c.bf16 %v837, %v836
    %v842 = vrot.slane %v838, 6
    %v843 = vrot.slane %v839, 6
    %846 = vst [vmem:[#allocation2 + $0x20] sm:$0xcc] %v842
    %847 = vst [vmem:[#allocation2 + $0x28] sm:$0xcc] %v843
    %848 = vrot.lane.b32.xlu0 %v688, 127
    %v849 = vpop.permute.xlu0 %848
    %850 = vrot.lane.b32.xlu0 %v689, 127
    %v851 = vpop.permute.xlu0 %850
    %852 = vrot.lane.b32.xlu0 %v690, 127
    %v853 = vpop.permute.xlu0 %852
    %854 = vrot.lane.b32.xlu0 %v691, 127
    %v855 = vpop.permute.xlu0 %854
    %v856 = vsel %vm328, %v853, %v855
    %v857 = vsel %vm328, %v851, %v853
    %v858 = vsel %vm328, %v849, %v851
    %v859 = vsel %vm328, %v855, %v849
    %v860 = vld [vmem:[%s333] ss:$8 sm:$0xf]
    %v862 = vperm.slane %v860, 0
    %v863 = vperm.slane %v860, 1
    %v864 = vperm.slane %v860, 2
    %v865 = vperm.slane %v860, 3
    %v870 = vmul.f32 %v858, %v862
    %v871 = vmul.f32 %v857, %v863
    %v872 = vmul.f32 %v856, %v864
    %v873 = vmul.f32 %v859, %v865
    %v874 = vpack.c.bf16 %v871, %v870
    %v875 = vpack.c.bf16 %v873, %v872
    %876 = vst [vmem:[#allocation2 + $0x30] sm:$0x33] %v874
    %877 = vst [vmem:[#allocation2 + $0x38] sm:$0x33] %v875
    %878 = vrot.lane.b32.xlu0 %v688, 113
    %v879 = vpop.permute.xlu0 %878
    %880 = vrot.lane.b32.xlu0 %v689, 113
    %v881 = vpop.permute.xlu0 %880
    %882 = vrot.lane.b32.xlu0 %v690, 113
    %v883 = vpop.permute.xlu0 %882
    %884 = vrot.lane.b32.xlu0 %v691, 113
    %v885 = vpop.permute.xlu0 %884
    %v886 = vsel %vm371, %v883, %v885
    %v887 = vsel %vm371, %v881, %v883
    %v888 = vsel %vm371, %v879, %v881
    %v889 = vsel %vm371, %v885, %v879
    %v890 = vld [vmem:[%s376] ss:$8 sm:$0xf]
    %v892 = vperm.slane %v890, 0
    %v893 = vperm.slane %v890, 1
    %v894 = vperm.slane %v890, 2
    %v895 = vperm.slane %v890, 3
    %v900 = vmul.f32 %v888, %v892
    %v901 = vmul.f32 %v887, %v893
    %v902 = vmul.f32 %v886, %v894
    %v903 = vmul.f32 %v889, %v895
    %v904 = vpack.c.bf16 %v901, %v900
    %v905 = vpack.c.bf16 %v903, %v902
    %v908 = vrot.slane %v904, 6
    %v909 = vrot.slane %v905, 6
    %912 = vst [vmem:[#allocation2 + $0x30] sm:$0xcc] %v908
    %913 = vst [vmem:[#allocation2 + $0x38] sm:$0xcc] %v909
    %914 = vrot.lane.b32.xlu0 %v688, 112
    %v915 = vpop.permute.xlu0 %914
    %916 = vrot.lane.b32.xlu0 %v689, 112
    %v917 = vpop.permute.xlu0 %916
    %918 = vrot.lane.b32.xlu0 %v690, 112
    %v919 = vpop.permute.xlu0 %918
    %920 = vrot.lane.b32.xlu0 %v691, 112
    %v921 = vpop.permute.xlu0 %920
    %v922 = vsel %vm420, %v919, %v921
    %v923 = vsel %vm420, %v917, %v919
    %v924 = vsel %vm420, %v915, %v917
    %v925 = vsel %vm420, %v921, %v915
    %v926 = vld [vmem:[%s425] ss:$8 sm:$0xf]
    %v928 = vperm.slane %v926, 0
    %v929 = vperm.slane %v926, 1
    %v930 = vperm.slane %v926, 2
    %v931 = vperm.slane %v926, 3
    %v936 = vmul.f32 %v924, %v928
    %v937 = vmul.f32 %v923, %v929
    %v938 = vmul.f32 %v922, %v930
    %v939 = vmul.f32 %v925, %v931
    %v940 = vpack.c.bf16 %v937, %v936
    %v941 = vpack.c.bf16 %v939, %v938
    %942 = vst [vmem:[#allocation2 + $0x40] sm:$0x33] %v940
    %943 = vst [vmem:[#allocation2 + $0x48] sm:$0x33] %v941
    %944 = vrot.lane.b32.xlu0 %v688, 111
    %v945 = vpop.permute.xlu0 %944
    %946 = vrot.lane.b32.xlu0 %v689, 111
    %v947 = vpop.permute.xlu0 %946
    %948 = vrot.lane.b32.xlu0 %v690, 111
    %v949 = vpop.permute.xlu0 %948
    %950 = vrot.lane.b32.xlu0 %v691, 111
    %v951 = vpop.permute.xlu0 %950
    %v952 = vsel %vm463, %v949, %v951
    %v953 = vsel %vm463, %v947, %v949
    %v954 = vsel %vm463, %v945, %v947
    %v955 = vsel %vm463, %v951, %v945
    %v956 = vld [vmem:[%s468] ss:$8 sm:$0xf]
    %v958 = vperm.slane %v956, 0
    %v959 = vperm.slane %v956, 1
    %v960 = vperm.slane %v956, 2
    %v961 = vperm.slane %v956, 3
    %v966 = vmul.f32 %v954, %v958
    %v967 = vmul.f32 %v953, %v959
    %v968 = vmul.f32 %v952, %v960
    %v969 = vmul.f32 %v955, %v961
    %v970 = vpack.c.bf16 %v967, %v966
    %v971 = vpack.c.bf16 %v969, %v968
    %v974 = vrot.slane %v970, 6
    %v975 = vrot.slane %v971, 6
    %978 = vst [vmem:[#allocation2 + $0x40] sm:$0xcc] %v974
    %979 = vst [vmem:[#allocation2 + $0x48] sm:$0xcc] %v975
    %v980 = vld [vmem:[#allocation6] sm:$0xf]
    %v981 = vld [vmem:[#allocation6 + $0x4] sm:$0xf]
    %v982 = vld [vmem:[#allocation2] sm:$0xff]
    %v983 = vld [vmem:[#allocation2 + $0x8] sm:$0xff]
    %v984 = vld [vmem:[#allocation2 + $0x10] sm:$0xff]
    %v985 = vld [vmem:[#allocation2 + $0x18] sm:$0xff]
    %v986 = vld [vmem:[#allocation2 + $0x20] sm:$0xff]
    %v987 = vld [vmem:[#allocation2 + $0x28] sm:$0xff]
    %v988 = vld [vmem:[#allocation2 + $0x30] sm:$0xff]
    %v989 = vld [vmem:[#allocation2 + $0x38] sm:$0xff]
    %v990 = vld [vmem:[#allocation2 + $0x40] sm:$0xff]
    %v991 = vld [vmem:[#allocation2 + $0x48] sm:$0xff]
    %v994 = vunpack.c.l.b16 %v980
    %v995 = vunpack.c.l.b16 %v981
    %v996 = vpack.c.b16 %v995, %v994
    %v1007 = vunpack.c.l.b16 %v982
    %v1008 = vunpack.c.h.b16 %v982
    %v1009 = vunpack.c.l.b16 %v983
    %v1010 = vunpack.c.h.b16 %v983
    %v1011 = vunpack.c.l.b16 %v984
    %v1012 = vunpack.c.h.b16 %v984
    %v1013 = vunpack.c.l.b16 %v985
    %v1014 = vunpack.c.h.b16 %v985
    %v1015 = vunpack.c.l.b16 %v986
    %v1016 = vunpack.c.h.b16 %v986
    %v1017 = vunpack.c.l.b16 %v987
    %v1018 = vunpack.c.h.b16 %v987
    %v1019 = vunpack.c.l.b16 %v988
    %v1020 = vunpack.c.h.b16 %v988
    %v1021 = vunpack.c.l.b16 %v989
    %v1022 = vunpack.c.h.b16 %v989
    %v1023 = vunpack.c.l.b16 %v990
    %v1024 = vunpack.c.h.b16 %v990
    %v1025 = vunpack.c.l.b16 %v991
    %v1026 = vunpack.c.h.b16 %v991
    %v1027 = vpack.c.b16 %v1011, %v1007
    %v1028 = vpack.c.b16 %v1012, %v1008
    %v1029 = vpack.c.b16 %v1013, %v1009
    %v1030 = vpack.c.b16 %v1014, %v1010
    %v1031 = vpack.c.b16 %v1019, %v1015
    %v1032 = vpack.c.b16 %v1020, %v1016
    %v1033 = vpack.c.b16 %v1021, %v1017
    %v1034 = vpack.c.b16 %v1022, %v1018
    %v1035 = vpack.c.b16 %v1023, %v1023
    %v1036 = vpack.c.b16 %v1024, %v1024
    %v1037 = vpack.c.b16 %v1025, %v1025
    %v1038 = vpack.c.b16 %v1026, %v1026
    %v1048 = vsel %vm560, %v996, 0
    %v1051 = vsel %vm279, %v1035, 0
    %v1054 = vsel %vm279, %v1036, 0
    %v1057 = vsel %vm279, %v1037, 0
    %v1060 = vsel %vm279, %v1038, 0
    %1062 = vmatpush.bf16.msra.mxu0 0
    %1063 = vmatpush.bf16.msra.mxu0 0
    %1064 = vmatpush.bf16.msra.mxu0 0
    %1065 = vmatpush.bf16.msra.mxu0 0
    %1066 = vmatpush.bf16.msra.mxu0 0
    %1067 = vmatpush.bf16.msra.mxu0 %v1051
    %1068 = vmatpush.bf16.msra.mxu0 %v1031
    %1069 = vmatpush.bf16.msra.mxu0 %v1027
    %1070 = vmatmul.bf16.gmra.mxu0 %v1048
    %v1071 = vpop.f32.mrf.mxu0
    %v1072 = vadd.f32 0.0, %v1071
    %v1073 = vpop.f32.mrf.mxu0
    %v1074 = vadd.f32 0.0, %v1073
    %1075 = vdwg.mxu0
    %1076 = vmatpush.bf16.msra.mxu0 0
    %1077 = vmatpush.bf16.msra.mxu0 0
    %1078 = vmatpush.bf16.msra.mxu0 0
    %1079 = vmatpush.bf16.msra.mxu0 0
    %1080 = vmatpush.bf16.msra.mxu0 0
    %1081 = vmatpush.bf16.msra.mxu0 %v1054
    %1082 = vmatpush.bf16.msra.mxu0 %v1032
    %1083 = vmatpush.bf16.msra.mxu0 %v1028
    %1084 = vmatmul.bf16.gmra.mxu0 %v1048
    %v1085 = vpop.f32.mrf.mxu0
    %v1086 = vadd.f32 0.0, %v1085
    %v1087 = vpop.f32.mrf.mxu0
    %v1088 = vadd.f32 0.0, %v1087
    %1089 = vdwg.mxu0
    %1090 = vmatpush.bf16.msra.mxu0 0
    %1091 = vmatpush.bf16.msra.mxu0 0
    %1092 = vmatpush.bf16.msra.mxu0 0
    %1093 = vmatpush.bf16.msra.mxu0 0
    %1094 = vmatpush.bf16.msra.mxu0 0
    %1095 = vmatpush.bf16.msra.mxu0 %v1057
    %1096 = vmatpush.bf16.msra.mxu0 %v1033
    %1097 = vmatpush.bf16.msra.mxu0 %v1029
    %1098 = vmatmul.bf16.gmra.mxu0 %v1048
    %v1099 = vpop.f32.mrf.mxu0
    %v1100 = vadd.f32 0.0, %v1099
    %v1101 = vpop.f32.mrf.mxu0
    %v1102 = vadd.f32 0.0, %v1101
    %1103 = vdwg.mxu0
    %1104 = vmatpush.bf16.msra.mxu0 0
    %1105 = vmatpush.bf16.msra.mxu0 0
    %1106 = vmatpush.bf16.msra.mxu0 0
    %1107 = vmatpush.bf16.msra.mxu0 0
    %1108 = vmatpush.bf16.msra.mxu0 0
    %1109 = vmatpush.bf16.msra.mxu0 %v1060
    %1110 = vmatpush.bf16.msra.mxu0 %v1034
    %1111 = vmatpush.bf16.msra.mxu0 %v1030
    %1112 = vmatmul.bf16.gmra.mxu0 %v1048
    %v1113 = vpop.f32.mrf.mxu0
    %v1114 = vadd.f32 0.0, %v1113
    %v1115 = vpop.f32.mrf.mxu0
    %v1116 = vadd.f32 0.0, %v1115
    %1117 = vdwg.mxu0
    %v1118 = vld [vmem:[%s7] sm:$0xff]
    %1120 = vset.pattern.permute.xlu0 0
    %1121 = vperm.xlu0 %1120, %v1118
    %v1122 = vpop.permute.xlu0 %1121
    %v1124 = vadd.f32 %v1072, %v1122
    %v1125 = vadd.f32 %v1086, %v1122
    %v1126 = vadd.f32 %v1100, %v1122
    %v1127 = vadd.f32 %v1114, %v1122
    %v1128 = vmax.f32 %v1124, 0.0
    %v1129 = vmax.f32 %v1125, 0.0
    %v1130 = vmax.f32 %v1126, 0.0
    %v1131 = vmax.f32 %v1127, 0.0
    %v1132 = vadd.f32 %v1128, %v1074
    %v1133 = vadd.f32 %v1129, %v1088
    %v1134 = vadd.f32 %v1130, %v1102
    %v1135 = vadd.f32 %v1131, %v1116
    %v1136 = vld [vmem:[%s8] sm:$0xff]
    %1138 = vset.pattern.permute.xlu0 0
    %1139 = vperm.xlu0 %1138, %v1136
    %v1140 = vpop.permute.xlu0 %1139
    %v1142 = vadd.f32 %v1132, %v1140
    %v1143 = vadd.f32 %v1133, %v1140
    %v1144 = vadd.f32 %v1134, %v1140
    %v1145 = vadd.f32 %v1135, %v1140
    %1146 = vst [vmem:[#allocation8] sm:$0xff] %v1142
    %1147 = vst [vmem:[#allocation8 + $0x8] sm:$0xff] %v1143
    %1148 = vst [vmem:[#allocation8 + $0x10] sm:$0xff] %v1144
    %1149 = vst [vmem:[#allocation8 + $0x18] sm:$0xff] %v1145
    // Predicated region
    $region46: #{tpu_custom_call.1} parent=1 // pred_check
      _
    $region47: #{tpu_custom_call.1} parent=1 // pred_check_branch
      %1151 = sbr.rel (0) target = $region49
    $region48: #{tpu_custom_call.1} parent=1 // pred_region
      %1153 = vsyncadd [#allocation5], 0
      %s1155 = sshll.u32 [#allocation8], 4
      %s1156 = int_to_ptr.vmem [resolvable:$true] %s1155
      %s1157 = sshll.u32 %s9, 4
      %s1158 = int_to_ptr.hbm [resolvable:$true] %s1157
      %1160 = dma.vmem_to_hbm [thread:$0]  %s1156, 512, %s1158, [#allocation5]
    $region49: #{tpu_custom_call.1} parent=1 // pred_fallthru
      _
    // Predicated region
    $region50: #{tpu_custom_call.1} parent=1 // pred_check
      _
    $region51: #{tpu_custom_call.1} parent=1 // pred_check_branch
      %1162 = sbr.rel (0) target = $region53
    $region52: #{tpu_custom_call.1} parent=1 // pred_region
      %1164 = dma.done [#allocation5], 512
    $region53: #{tpu_custom_call.1} parent=1 // pred_fallthru
      _
    %1165 = vsyncpa [#allocation4], 1
    %1166 = vsyncpa [#allocation7], 1
    %1167 = vsyncpa [#allocation5], 1

</llo_original>
